<compile_context>
chip_gen: v7x
topology: tpu7x:2x2x1
jax: 0.10.0
libtpu: 0.0.40
codegen_flags: <defaults>
</compile_context>

<pallas_src>
import numpy as np
import jax
import jax.numpy as jnp
from jax.experimental import pallas as pl
from jax.experimental.pallas import tpu as pltpu


def _round_up(x, m):
    return (x + m - 1) // m * m


def _vmem_capacity_bytes():
    try:
        return int(pltpu.get_tpu_info().vmem_capacity_bytes)
    except Exception:
        return 64 * 1024 * 1024            # conservative fallback (v7x physical)


def _vmem_limit_bytes():
    # ~3/4 of physical VMEM: ~96 MiB on 128-MiB parts (v5e/v6e), ~48 MiB on v7x.
    return (_vmem_capacity_bytes() * 3) // 4


# ----------------------------------------------------------------------------
# Kernel 1: channel map + fused(linear(d->3) -> segmentation-net stand-in(3->F))
#   grid = (bs, ne_pad // TH); TH head entities batched per step; the whole
#   (heads, ne_pad, L) attention block stays VMEM-resident per batch element.
# ----------------------------------------------------------------------------
def _channel_map_kernel(att_ref, seq_ref, wf_ref, bf_ref, out_ref):
    f32 = jnp.float32
    heads, ne, L = att_ref.shape
    TH = out_ref.shape[0]
    F = wf_ref.shape[1]
    row0 = pl.multiple_of(pl.program_id(1) * TH, TH)

    # head x tail pair product summed over attention heads
    # (lane-dense (ne, L) slabs, f32 accumulation -> v5e-safe)
    raw = jnp.zeros((TH, ne, L), f32)
    for h in range(heads):                                        # static unroll
        slab = att_ref[h].astype(f32)                             # (ne, L) tails
        head_rows = att_ref[h, pl.ds(row0, TH), :].astype(f32)    # (TH, L) heads
        raw = raw + head_rows[:, None, :] * slab[None, :, :]      # (TH, ne, L)

    # reference: ht = mean_heads(.); ht = ht / (ht.sum(-1) + 1e-5)
    # 1/heads folded into the denominator; reciprocal on the EUP slot.
    denom = jnp.sum(raw, axis=-1, keepdims=True) + jnp.float32(1e-5 * heads)
    ht = raw * pl.reciprocal(denom, approx=True)                  # (TH, ne, L)

    # contract('ld,rl->rd', seq, ht) == ht @ seq     (bf16 MXU, f32 accumulate)
    fm = jnp.dot(ht.reshape(TH * ne, L).astype(seq_ref.dtype), seq_ref[...],
                 preferred_element_type=f32)                      # (TH*ne, d)
    # fused linear(d->3) + 1x1-conv(3->F) == one (d, F) matmul
    out = jnp.dot(fm.astype(wf_ref.dtype), wf_ref[...],
                  preferred_element_type=f32) + bf_ref[...]       # (TH*ne, F)
    out_ref[...] = out.reshape(TH, ne, F).astype(out_ref.dtype)


def channel_attn_map(entity_att, seq, w_lin, b_lin, w_seg, b_seg,
                     compute_dtype=jnp.bfloat16):
    bs, ne, heads, L = entity_att.shape
    d = seq.shape[-1]
    F = w_seg.shape[1]

    # TODO(synk): segmentation_net (a UNet) is never defined in the reference
    # __init__; replaced by a deterministic 1x1-conv (3 -> featureDim//2),
    # folded with self.linear into a single (d, F) weight.
    w_f = jnp.dot(w_lin, w_seg)                     # (d, F)
    b_f = jnp.dot(b_lin, w_seg) + b_seg             # (1, F)

    # pad entity axis to a sublane-aligned multiple of 8; move heads out of the
    # minor dims so each per-head slab is lane-dense (ne_pad, L).
    ne_pad = _round_up(max(ne, 8), 8)
    ea = entity_att
    if ne_pad != ne:
        ea = jnp.pad(ea, ((0, 0), (0, ne_pad - ne), (0, 0), (0, 0)))
    ea = jnp.transpose(ea, (0, 2, 1, 3)).astype(compute_dtype)  # (bs, h, ne_pad, L)
    seq_c = seq.astype(compute_dtype)

    TH = 16 if ne_pad % 16 == 0 else 8              # head-entity tile (>= 8 rows)
    TH = min(TH, ne_pad)

    out = pl.pallas_call(
        _channel_map_kernel,
        out_shape=jax.ShapeDtypeStruct((bs, ne_pad, ne_pad, F), compute_dtype),
        grid=(bs, ne_pad // TH),
        in_specs=[
            # full attention block; constant along i -> resident per batch elem
            pl.BlockSpec((None, heads, ne_pad, L), lambda b, i: (b, 0, 0, 0)),
            pl.BlockSpec((None, L, d), lambda b, i: (b, 0, 0)),
            pl.BlockSpec((d, F), lambda b, i: (0, 0)),
            pl.BlockSpec((1, F), lambda b, i: (0, 0)),
        ],
        out_specs=pl.BlockSpec((None, TH, ne_pad, F), lambda b, i: (b, i, 0, 0)),
        compiler_params=pltpu.CompilerParams(
            dimension_semantics=("parallel", "parallel"),
            vmem_limit_bytes=_vmem_limit_bytes()),
    )(ea, seq_c, w_f.astype(compute_dtype), b_f.astype(jnp.float32))
    return out                                       # (bs, ne_pad, ne_pad, F) bf16


# ----------------------------------------------------------------------------
# Kernel 2: head/tail extractor + tanh + nn.Bilinear, tiled over pairs & labels
#   Bilinear(hs, ts)[n,k] = sum_ij hs[n,i] W[k,i,j] ts[n,j] + b[k]
#   computed per label block as:  tmp = hs @ Wr_kb     (Wr[i, k*F+j] = W[k,i,j])
#                                 logits[:,k] = sum_j tmp[:, k*F+j] * ts[:,j]
# ----------------------------------------------------------------------------
def _head_bilinear_kernel(hs_ref, ts_ref, ht_ref, wh_ref, bh_ref,
                          wt_ref, bt_ref, wr_ref, bb_ref, out_ref):
    f32 = jnp.float32
    F = wh_ref.shape[1]
    KB = out_ref.shape[1]

    h_t = ht_ref[...].astype(f32)                                    # (TN, F)
    hs = jnp.tanh(jnp.dot(hs_ref[...], wh_ref[...],
                          preferred_element_type=f32) + bh_ref[...] + h_t)
    ts = jnp.tanh(jnp.dot(ts_ref[...], wt_ref[...],
                          preferred_element_type=f32) + bt_ref[...] + h_t)

    # one lane-dense MXU matmul per label block  (TN, F) @ (F, KB*F)
    tmp = jnp.dot(hs.astype(wr_ref.dtype), wr_ref[...],
                  preferred_element_type=f32)                        # (TN, KB*F)

    # segmented multiply-reduce against ts; columns accumulated in registers
    # and written with ONE dense store (no per-column masked stores).
    cols = []
    for k in range(KB):                                              # KB <= 32
        seg = tmp[:, k * F:(k + 1) * F]                              # (TN, F)
        cols.append(jnp.sum(seg * ts, axis=-1, keepdims=True))
    logits = jnp.concatenate(cols, axis=-1) + bb_ref[...]            # (TN, KB)
    out_ref[...] = logits.astype(out_ref.dtype)


def head_bilinear(hs_raw, ts_raw, h_t, w_head, b_head, w_tail, b_tail,
                  w_bil, b_bil, compute_dtype=jnp.bfloat16):
    N, d = hs_raw.shape
    F = w_head.shape[1]
    K = w_bil.shape[0]

    # ---- label-dimension padding + tiling (VMEM-safe on v7x) ---------------
    KB = min(32, _round_up(K, 8))
    Kp = _round_up(K, KB)
    n_kb = Kp // KB
    w_bil_p = jnp.pad(w_bil, ((0, Kp - K), (0, 0), (0, 0)))
    b_bil_p = jnp.pad(b_bil, ((0, 0), (0, Kp - K)))
    # Wr[i, k*F + j] = W[k, i, j]
    w_r = jnp.transpose(w_bil_p, (1, 0, 2)).reshape(F, Kp * F)
    b_r = b_bil_p.reshape(n_kb, 1, KB)

    # ---- pair-dimension tiling (per-generation) ----------------------------
    TN = 512 if _vmem_capacity_bytes() >= 96 * 1024 * 1024 else 256
    TN = min(TN, _round_up(N, 8))
    Np = _round_up(N, TN)
    pad = Np - N

    def pad_n(x):
        return jnp.pad(x, ((0, pad), (0, 0))) if pad else x

    hs_p = pad_n(hs_raw).astype(compute_dtype)
    ts_p = pad_n(ts_raw).astype(compute_dtype)
    ht_p = pad_n(h_t).astype(compute_dtype)

    out = pl.pallas_call(
        _head_bilinear_kernel,
        out_shape=jax.ShapeDtypeStruct((n_kb, Np, KB), jnp.float32),
        # label blocks outer -> the big Wr slab stays resident across pairs
        grid=(n_kb, Np // TN),
        in_specs=[
            pl.BlockSpec((TN, d), lambda kb, n: (n, 0)),
            pl.BlockSpec((TN, d), lambda kb, n: (n, 0)),
            pl.BlockSpec((TN, F), lambda kb, n: (n, 0)),
            pl.BlockSpec((d, F), lambda kb, n: (0, 0)),
            pl.BlockSpec((1, F), lambda kb, n: (0, 0)),
            pl.BlockSpec((d, F), lambda kb, n: (0, 0)),
            pl.BlockSpec((1, F), lambda kb, n: (0, 0)),
            pl.BlockSpec((F, KB * F), lambda kb, n: (0, kb)),
            pl.BlockSpec((None, 1, KB), lambda kb, n: (kb, 0, 0)),
        ],
        out_specs=pl.BlockSpec((None, TN, KB), lambda kb, n: (kb, n, 0)),
        compiler_params=pltpu.CompilerParams(
            dimension_semantics=("parallel", "parallel"),
            vmem_limit_bytes=_vmem_limit_bytes()),
    )(hs_p, ts_p, ht_p,
      w_head.astype(compute_dtype), b_head.astype(jnp.float32),
      w_tail.astype(compute_dtype), b_tail.astype(jnp.float32),
      w_r.astype(compute_dtype), b_r.astype(jnp.float32))

    logits = jnp.transpose(out, (1, 0, 2)).reshape(Np, Kp)
    return logits[:N, :K]


# ----------------------------------------------------------------------------
# Plain-JAX glue (ragged gathers, mention pooling, thresholding)
# ----------------------------------------------------------------------------
def get_hrt(seq, att, entity_pos, hts, offset, min_height):
    bs, h, _, L = att.shape
    hidden = seq.shape[-1]
    hss, tss, entity_as = [], [], []
    for i, eps in enumerate(entity_pos):
        embs, atts = [], []
        e_att = jnp.zeros((h, L), jnp.float32)
        for e in eps:
            if len(e) > 1:
                e_emb_l, e_att_l = [], []
                for (start, end, sent_id) in e:
                    if start + offset < L:
                        e_emb_l.append(seq[i, start + offset])
                        e_att_l.append(att[i, :, start + offset])
                if e_emb_l:
                    e_emb = jax.nn.logsumexp(jnp.stack(e_emb_l, axis=0), axis=0)
                    e_att = jnp.stack(e_att_l, axis=0).mean(axis=0)
                else:
                    e_emb = jnp.zeros((hidden,), jnp.float32)
                    e_att = jnp.zeros((h, L), jnp.float32)
            else:
                start, end, sent_id = e[0]
                if start + offset < L:
                    e_emb = seq[i, start + offset]
                    e_att = att[i, :, start + offset]
                else:
                    e_emb = jnp.zeros((hidden,), jnp.float32)
                    e_att = jnp.zeros((h, L), jnp.float32)
            embs.append(e_emb)
            atts.append(e_att)
        for _ in range(min_height - len(eps)):
            atts.append(e_att)
        embs = jnp.stack(embs, axis=0)                 # (n_e, hidden)
        atts = jnp.stack(atts, axis=0)                 # (min_height, h, L)
        entity_as.append(atts)
        ht_i = np.asarray(hts[i], dtype=np.int32)
        hss.append(embs[ht_i[:, 0]])
        tss.append(embs[ht_i[:, 1]])
    return (jnp.concatenate(hss, axis=0),
            jnp.concatenate(tss, axis=0),
            jnp.stack(entity_as, axis=0))              # (bs, min_height, h, L)


def get_ht(attn_map, hts):
    # single flat gather instead of a per-pair Python loop of gathers
    bs, ne, _, F = attn_map.shape
    idx = []
    for i, pairs in enumerate(hts):
        base = i * ne * ne
        for (hi, ti) in pairs:
            idx.append(base + hi * ne + ti)
    idx = jnp.asarray(np.asarray(idx, dtype=np.int32))
    return jnp.take(attn_map.reshape(-1, F), idx, axis=0)   # (N, F)


def get_label(logits, num_labels=-1):
    # ATLoss-style adaptive thresholding (class 0 is the threshold class).
    th = logits[:, :1]
    mask = logits > th
    if num_labels > 0:
        top_v = jax.lax.top_k(logits, num_labels)[0][:, -1:]
        mask = mask & (logits >= top_v)
    out = jnp.where(mask, 1.0, 0.0)
    out = out.at[:, 0].set(jnp.where(out.sum(axis=1) == 0, 1.0, 0.0))
    return out


def docre_forward(seq_out, attention, entity_pos, hts, params, min_height):
    ne = min_height
    # get_hrt (ragged mention pooling)
    hs_raw, ts_raw, entity_att = get_hrt(seq_out, attention, entity_pos, hts,
                                         offset=1, min_height=ne)
    # channel map: pair product formed in-kernel, TH head entities per step
    attn_map = channel_attn_map(entity_att, seq_out,
                                params["w_lin"], params["b_lin"],
                                params["w_seg"], params["b_seg"])  # (bs,nep,nep,F)
    h_t = get_ht(attn_map, hts)                        # (N, F) bf16
    logits = head_bilinear(hs_raw, ts_raw, h_t,
                           params["w_head"], params["b_head"],
                           params["w_tail"], params["b_tail"],
                           params["w_bil"], params["b_bil"])        # (N, K)
    pred = get_label(logits, num_labels=-1)
    # TODO(synk): balanced_loss training loss is not defined in the reference
    # snippet; only the labels=None inference path is reproduced.
    return {"pred": pred, "logits": logits}


# ----------------------------------------------------------------------------
# main
# ----------------------------------------------------------------------------
if __name__ == "__main__":
    key = jax.random.PRNGKey(0)
    ks = jax.random.split(key, 16)

    # Small, module-consistent shapes.
    bs, L, hidden, heads = 2, 64, 32, 4
    min_height = 4                  # args.max_height
    featureDim = 512
    F = featureDim // 2             # 256
    K = 8                           # config.num_labels

    # TODO(synk): BERT encoder (process_long_input / self.bert_model) is not
    # translatable without the transformer; deterministic synthetic encoder
    # outputs are used instead.
    seq_out = jax.random.normal(ks[0], (bs, L, hidden), jnp.float32)
    attention = jax.nn.softmax(
        jax.random.normal(ks[1], (bs, heads, L, L), jnp.float32), axis=-1)

    def init_w(k, shape, scale=0.05):
        return scale * jax.random.normal(k, shape, jnp.float32)

    params = {
        "w_lin":  init_w(ks[2], (hidden, 3)),      # nn.Linear(hidden, 3)
        "b_lin":  init_w(ks[3], (1, 3)),
        "w_seg":  init_w(ks[4], (3, F)),           # segmentation_net stand-in
        "b_seg":  init_w(ks[5], (1, F)),
        "w_head": init_w(ks[6], (hidden, F)),      # head_extractor
        "b_head": init_w(ks[7], (1, F)),
        "w_tail": init_w(ks[8], (hidden, F)),      # tail_extractor
        "b_tail": init_w(ks[9], (1, F)),
        "w_bil":  init_w(ks[10], (K, F, F)),       # nn.Bilinear weight (out,in1,in2)
        "b_bil":  init_w(ks[11], (1, K)),
    }

    # Ragged entity mentions: (start, end, sent_id) per mention.
    entity_pos = [
        [[(0, 1, 0)], [(3, 4, 0), (10, 11, 1)], [(20, 21, 1)], [(30, 31, 2)]],
        [[(2, 3, 0)], [(8, 9, 0), (15, 16, 1), (40, 41, 2)], [(50, 51, 3)]],
    ]
    hts = []
    for eps in entity_pos:
        n_e = len(eps)
        hts.append([(i, j) for i in range(n_e) for j in range(n_e) if i != j])

    out = docre_forward(seq_out, attention, entity_pos, hts, params, min_height)
    pred = jax.block_until_ready(out["pred"])
    logits = jax.block_until_ready(out["logits"])

    n_pairs = sum(len(p) for p in hts)
    assert pred.shape == (n_pairs, K)
    assert logits.shape == (n_pairs, K)
    assert bool(jnp.all(jnp.isfinite(logits)))
    print("KERNEL_OK")
</pallas_src>

<mosaic_0001>
module attributes {stable_mosaic.version = 11 : i64} {
  func.func @_channel_map_kernel(%arg0: i32, %arg1: i32, %arg2: memref<1x4x8x64xbf16, #tpu.memory_space<vmem>>, %arg3: memref<1x64x32xbf16, #tpu.memory_space<vmem>>, %arg4: memref<32x256xbf16, #tpu.memory_space<vmem>>, %arg5: memref<1x256xf32, #tpu.memory_space<vmem>>, %arg6: memref<1x8x8x256xbf16, #tpu.memory_space<vmem>>) attributes {dimension_semantics = [#tpu.dimension_semantics<parallel>, #tpu.dimension_semantics<parallel>], iteration_bounds = array<i64: 2, 1>, scalar_prefetch = 0 : i64, scratch_operands = 0 : i64, tpu.core_type = #tpu.core_type<tc>, window_params = [{transform_indices = @transform_0, window_bounds = array<i64: 1, 4, 8, 64>}, {transform_indices = @transform_1, window_bounds = array<i64: 1, 64, 32>}, {pipeline_mode = #tpu.pipeline_mode<synchronous>, transform_indices = @transform_2, window_bounds = array<i64: 32, 256>}, {pipeline_mode = #tpu.pipeline_mode<synchronous>, transform_indices = @transform_3, window_bounds = array<i64: 1, 256>}, {transform_indices = @transform_4, window_bounds = array<i64: 1, 8, 8, 256>}]} {
    %c8_i32 = arith.constant 8 : i32
    %0 = arith.muli %arg1, %c8_i32 : i32
    %1 = tpu.assume_multiple %0, 8 : i32
    %cst = arith.constant 0.000000e+00 : f32
    %2 = vector.broadcast %cst : f32 to vector<8x8x64xf32>
    %c0 = arith.constant 0 : index
    %c0_0 = arith.constant 0 : index
    %c0_1 = arith.constant 0 : index
    %c0_2 = arith.constant 0 : index
    %3 = vector.load %arg2[%c0, %c0_0, %c0_1, %c0_2] : memref<1x4x8x64xbf16, #tpu.memory_space<vmem>>, vector<1x1x8x64xbf16>
    %4 = vector.shape_cast %3 : vector<1x1x8x64xbf16> to vector<8x64xbf16>
    %5 = arith.extf %4 : vector<8x64xbf16> to vector<8x64xf32>
    %c0_3 = arith.constant 0 : index
    %c0_4 = arith.constant 0 : index
    %6 = arith.index_cast %1 : i32 to index
    %c0_5 = arith.constant 0 : index
    %7 = vector.load %arg2[%c0_3, %c0_4, %6, %c0_5] : memref<1x4x8x64xbf16, #tpu.memory_space<vmem>>, vector<1x1x8x64xbf16>
    %8 = vector.shape_cast %7 : vector<1x1x8x64xbf16> to vector<8x64xbf16>
    %9 = arith.extf %8 : vector<8x64xbf16> to vector<8x64xf32>
    %10 = vector.shape_cast %9 : vector<8x64xf32> to vector<8x1x64xf32>
    %11 = vector.shape_cast %5 : vector<8x64xf32> to vector<1x8x64xf32>
    %12 = vector.broadcast %10 : vector<8x1x64xf32> to vector<8x8x64xf32>
    %13 = vector.broadcast %11 : vector<1x8x64xf32> to vector<8x8x64xf32>
    %14 = arith.mulf %12, %13 : vector<8x8x64xf32>
    %15 = arith.addf %2, %14 : vector<8x8x64xf32>
    %c0_6 = arith.constant 0 : index
    %c1 = arith.constant 1 : index
    %c0_7 = arith.constant 0 : index
    %c0_8 = arith.constant 0 : index
    %16 = vector.load %arg2[%c0_6, %c1, %c0_7, %c0_8] : memref<1x4x8x64xbf16, #tpu.memory_space<vmem>>, vector<1x1x8x64xbf16>
    %17 = vector.shape_cast %16 : vector<1x1x8x64xbf16> to vector<8x64xbf16>
    %18 = arith.extf %17 : vector<8x64xbf16> to vector<8x64xf32>
    %c0_9 = arith.constant 0 : index
    %c1_10 = arith.constant 1 : index
    %19 = arith.index_cast %1 : i32 to index
    %c0_11 = arith.constant 0 : index
    %20 = vector.load %arg2[%c0_9, %c1_10, %19, %c0_11] : memref<1x4x8x64xbf16, #tpu.memory_space<vmem>>, vector<1x1x8x64xbf16>
    %21 = vector.shape_cast %20 : vector<1x1x8x64xbf16> to vector<8x64xbf16>
    %22 = arith.extf %21 : vector<8x64xbf16> to vector<8x64xf32>
    %23 = vector.shape_cast %22 : vector<8x64xf32> to vector<8x1x64xf32>
    %24 = vector.shape_cast %18 : vector<8x64xf32> to vector<1x8x64xf32>
    %25 = vector.broadcast %23 : vector<8x1x64xf32> to vector<8x8x64xf32>
    %26 = vector.broadcast %24 : vector<1x8x64xf32> to vector<8x8x64xf32>
    %27 = arith.mulf %25, %26 : vector<8x8x64xf32>
    %28 = arith.addf %15, %27 : vector<8x8x64xf32>
    %c0_12 = arith.constant 0 : index
    %c2 = arith.constant 2 : index
    %c0_13 = arith.constant 0 : index
    %c0_14 = arith.constant 0 : index
    %29 = vector.load %arg2[%c0_12, %c2, %c0_13, %c0_14] : memref<1x4x8x64xbf16, #tpu.memory_space<vmem>>, vector<1x1x8x64xbf16>
    %30 = vector.shape_cast %29 : vector<1x1x8x64xbf16> to vector<8x64xbf16>
    %31 = arith.extf %30 : vector<8x64xbf16> to vector<8x64xf32>
    %c0_15 = arith.constant 0 : index
    %c2_16 = arith.constant 2 : index
    %32 = arith.index_cast %1 : i32 to index
    %c0_17 = arith.constant 0 : index
    %33 = vector.load %arg2[%c0_15, %c2_16, %32, %c0_17] : memref<1x4x8x64xbf16, #tpu.memory_space<vmem>>, vector<1x1x8x64xbf16>
    %34 = vector.shape_cast %33 : vector<1x1x8x64xbf16> to vector<8x64xbf16>
    %35 = arith.extf %34 : vector<8x64xbf16> to vector<8x64xf32>
    %36 = vector.shape_cast %35 : vector<8x64xf32> to vector<8x1x64xf32>
    %37 = vector.shape_cast %31 : vector<8x64xf32> to vector<1x8x64xf32>
    %38 = vector.broadcast %36 : vector<8x1x64xf32> to vector<8x8x64xf32>
    %39 = vector.broadcast %37 : vector<1x8x64xf32> to vector<8x8x64xf32>
    %40 = arith.mulf %38, %39 : vector<8x8x64xf32>
    %41 = arith.addf %28, %40 : vector<8x8x64xf32>
    %c0_18 = arith.constant 0 : index
    %c3 = arith.constant 3 : index
    %c0_19 = arith.constant 0 : index
    %c0_20 = arith.constant 0 : index
    %42 = vector.load %arg2[%c0_18, %c3, %c0_19, %c0_20] : memref<1x4x8x64xbf16, #tpu.memory_space<vmem>>, vector<1x1x8x64xbf16>
    %43 = vector.shape_cast %42 : vector<1x1x8x64xbf16> to vector<8x64xbf16>
    %44 = arith.extf %43 : vector<8x64xbf16> to vector<8x64xf32>
    %c0_21 = arith.constant 0 : index
    %c3_22 = arith.constant 3 : index
    %45 = arith.index_cast %1 : i32 to index
    %c0_23 = arith.constant 0 : index
    %46 = vector.load %arg2[%c0_21, %c3_22, %45, %c0_23] : memref<1x4x8x64xbf16, #tpu.memory_space<vmem>>, vector<1x1x8x64xbf16>
    %47 = vector.shape_cast %46 : vector<1x1x8x64xbf16> to vector<8x64xbf16>
    %48 = arith.extf %47 : vector<8x64xbf16> to vector<8x64xf32>
    %49 = vector.shape_cast %48 : vector<8x64xf32> to vector<8x1x64xf32>
    %50 = vector.shape_cast %44 : vector<8x64xf32> to vector<1x8x64xf32>
    %51 = vector.broadcast %49 : vector<8x1x64xf32> to vector<8x8x64xf32>
    %52 = vector.broadcast %50 : vector<1x8x64xf32> to vector<8x8x64xf32>
    %53 = arith.mulf %51, %52 : vector<8x8x64xf32>
    %54 = arith.addf %41, %53 : vector<8x8x64xf32>
    %cst_24 = arith.constant dense<0.000000e+00> : vector<8x8xf32>
    %55 = vector.multi_reduction <add>, %54, %cst_24 [2] : vector<8x8x64xf32> to vector<8x8xf32>
    %56 = vector.shape_cast %55 : vector<8x8xf32> to vector<8x8x1xf32>
    %cst_25 = arith.constant 4.000000e-05 : f32
    %57 = vector.broadcast %cst_25 : f32 to vector<8x8x1xf32>
    %58 = arith.addf %56, %57 : vector<8x8x1xf32>
    %59 = tpu.reciprocal %58 {approx = true} : vector<8x8x1xf32> -> vector<8x8x1xf32>
    %60 = vector.broadcast %59 : vector<8x8x1xf32> to vector<8x8x64xf32>
    %61 = arith.mulf %54, %60 : vector<8x8x64xf32>
    %62 = vector.shape_cast %61 : vector<8x8x64xf32> to vector<64x64xf32>
    %63 = arith.truncf %62 : vector<64x64xf32> to vector<64x64xbf16>
    %c0_26 = arith.constant 0 : index
    %c0_27 = arith.constant 0 : index
    %c0_28 = arith.constant 0 : index
    %64 = vector.load %arg3[%c0_26, %c0_27, %c0_28] : memref<1x64x32xbf16, #tpu.memory_space<vmem>>, vector<1x64x32xbf16>
    %65 = vector.shape_cast %64 : vector<1x64x32xbf16> to vector<64x32xbf16>
    %cst_29 = arith.constant dense<0.000000e+00> : vector<64x32xf32>
    %66 = tpu.matmul %63, %65, %cst_29 {dimension_numbers = #tpu.dot_dimension_numbers<[1], [0], [0], [1], [0, 0, 1, 1], [], []>} : vector<64x64xbf16>, vector<64x32xbf16>, vector<64x32xf32> -> vector<64x32xf32>
    %67 = arith.truncf %66 : vector<64x32xf32> to vector<64x32xbf16>
    %c0_30 = arith.constant 0 : index
    %c0_31 = arith.constant 0 : index
    %68 = vector.load %arg4[%c0_30, %c0_31] : memref<32x256xbf16, #tpu.memory_space<vmem>>, vector<32x256xbf16>
    %cst_32 = arith.constant dense<0.000000e+00> : vector<64x256xf32>
    %69 = tpu.matmul %67, %68, %cst_32 {dimension_numbers = #tpu.dot_dimension_numbers<[1], [0], [0], [1], [0, 0, 1, 1], [], []>} : vector<64x32xbf16>, vector<32x256xbf16>, vector<64x256xf32> -> vector<64x256xf32>
    %c0_33 = arith.constant 0 : index
    %c0_34 = arith.constant 0 : index
    %70 = vector.load %arg5[%c0_33, %c0_34] : memref<1x256xf32, #tpu.memory_space<vmem>>, vector<1x256xf32>
    %71 = vector.broadcast %70 : vector<1x256xf32> to vector<64x256xf32>
    %72 = arith.addf %69, %71 : vector<64x256xf32>
    %73 = vector.shape_cast %72 : vector<64x256xf32> to vector<8x8x256xf32>
    %74 = arith.truncf %73 : vector<8x8x256xf32> to vector<8x8x256xbf16>
    %c0_35 = arith.constant 0 : index
    %c0_36 = arith.constant 0 : index
    %c0_37 = arith.constant 0 : index
    %c0_38 = arith.constant 0 : index
    %75 = vector.load %arg6[%c0_35, %c0_36, %c0_37, %c0_38] : memref<1x8x8x256xbf16, #tpu.memory_space<vmem>>, vector<1x8x8x256xbf16>
    %76 = vector.shape_cast %75 : vector<1x8x8x256xbf16> to vector<8x8x256xbf16>
    %77 = vector.shape_cast %74 : vector<8x8x256xbf16> to vector<1x8x8x256xbf16>
    tpu.vector_store %arg6[%c0_35, %c0_36, %c0_37, %c0_38], %77 {strides = array<i32>} : memref<1x8x8x256xbf16, #tpu.memory_space<vmem>>, vector<1x8x8x256xbf16>,
    return
  }
  func.func @transform_0(%arg0: i32, %arg1: i32) -> (i32, i32, i32, i32) {
    %c0_i32 = arith.constant 0 : i32
    %c0_i32_0 = arith.constant 0 : i32
    %c0_i32_1 = arith.constant 0 : i32
    %c0_i32_2 = arith.constant 0 : i32
    return %arg0, %c0_i32, %c0_i32_0, %c0_i32_1 : i32, i32, i32, i32
  }
  func.func @transform_1(%arg0: i32, %arg1: i32) -> (i32, i32, i32) {
    %c0_i32 = arith.constant 0 : i32
    %c0_i32_0 = arith.constant 0 : i32
    %c0_i32_1 = arith.constant 0 : i32
    return %arg0, %c0_i32, %c0_i32_0 : i32, i32, i32
  }
  func.func @transform_2(%arg0: i32, %arg1: i32) -> (i32, i32) {
    %c0_i32 = arith.constant 0 : i32
    %c0_i32_0 = arith.constant 0 : i32
    %c0_i32_1 = arith.constant 0 : i32
    return %c0_i32, %c0_i32_0 : i32, i32
  }
  func.func @transform_3(%arg0: i32, %arg1: i32) -> (i32, i32) {
    %c0_i32 = arith.constant 0 : i32
    %c0_i32_0 = arith.constant 0 : i32
    %c0_i32_1 = arith.constant 0 : i32
    return %c0_i32, %c0_i32_0 : i32, i32
  }
  func.func @transform_4(%arg0: i32, %arg1: i32) -> (i32, i32, i32, i32) {
    %c0_i32 = arith.constant 0 : i32
    %c0_i32_0 = arith.constant 0 : i32
    %c0_i32_1 = arith.constant 0 : i32
    return %arg0, %arg1, %c0_i32, %c0_i32_0 : i32, i32, i32, i32
  }
}

</mosaic_0001>

<llo_original>
// kernel: tpu_custom_call.1
$region0: #{tpu_custom_call.1}
  #allocation0 [shape = 'u32[]', space=smem, size = 0x4, offset = 0x4, fixed_abs, tag = 'smem constant byte address 0x4 - core index']
  #allocation1 [shape = 'u32[144,128]{1,0:T(1,128)}', space=vmem, size = 0x12000, scoped, tag = 'internal scratch']
  %s0 = inlined_call_operand.vmem [shape: bf16[2,4,8,64], index: 0, kind: input, shape index: {}]
  %s1 = inlined_call_operand.vmem [shape: bf16[2,64,32], index: 1, kind: input, shape index: {}]
  %s2 = inlined_call_operand.vmem [shape: bf16[32,256], index: 2, kind: input, shape index: {}]
  %s3 = inlined_call_operand.vmem [shape: f32[1,256], index: 3, kind: input, shape index: {}]
  %s4 = inlined_call_operand.hbm [shape: bf16[2,8,8,256], index: 4, kind: output, shape index: {}]
  %s5 = sld [smem:[#allocation0]]
  $region49: #{tpu_custom_call.1} parent=0
    _
  %s7 = ssub.s32 1, %s5
  %s8 = scalar_select 0, %s7, %s5
  $region1: #{tpu_custom_call.1} parent=0
    #allocation2 [shape = 'u8[65536]{0}', space=vmem, size = 0x10000, scoped, tag = 'output window, operand 0']
    #allocation3 [shape = 's32[2]{0}', space=sflag, size = 0x8, scoped, tag = 'scoped memory for tpu_custom_call.1']
    %9 = vsyncpa [#allocation3], 0
    %s10 = scalar_lea.sflag [#allocation3], 1
    %11 = vsyncpa %s10, 0
    loop: start=0, step=1, limit=4
    $region2: #{tpu_custom_call.1} parent=1 // loop_pre_header
      _
    $region3: #{tpu_custom_call.1} parent=1 // loop_header
      %s13 = sphi 0, %s17
      %p14 = scmp.ge.s32.totalorder %s13, 4
      %s20 = sphi 0, %s32
      %s21 = sphi 0, %s28
      %s22 = sphi 0, %s20
      %s23 = sphi 0, %s21
      %s24 = sphi 0, %s22
      %s25 = sphi 0, %s23
      %s35 = sphi 0, %s37
      %s38 = sphi 0, %s35
      %s39 = sphi 0, %s38
      %s55 = sphi 0, %s39
      %s61 = sphi 0, %s63
      %s64 = sphi 0, %s61
      %s65 = sphi 0, %s64
      %s81 = sphi 0, %s65
      %s85 = sphi 0, %s85
      %s87 = sphi 0, %s85
      %s88 = sphi 0, %s87
      %s102 = sphi 0, %s88
      %s106 = sphi 0, %s106
      %s108 = sphi 0, %s106
      %s109 = sphi 0, %s108
      %s123 = sphi 0, %s109
      %s131 = sphi 0, %s133
      %s134 = sphi 0, %s131
      %s135 = sphi 0, %s134
      %s151 = sphi 0, %s135
    $region4: #{tpu_custom_call.1} parent=1 // loop_header_branch
      %16 = sbr.rel (%p14) target = $region8
    $region5: #{tpu_custom_call.1} parent=1 // loop_body
      %s18 = ssub.s32 %s13, 1
      %s19 = ssub.s32 %s13, 2
      %s26 = sadd.s32 1, %s21
      %p27 = scmp.ge.s32.totalorder %s26, 1
      %s28 = scalar_select %p27, 0, %s26
      %s29 = sadd.s32 1, %s20
      %s30 = scalar_select %p27, %s29, %s20
      %p31 = scmp.ge.s32.totalorder %s30, 2
      %s32 = scalar_select %p31, 0, %s30
      %s33 = ssub.s32 %s20, %s32
      %p34 = scmp.eq.s32.totalorder %s33, 0
      %s36 = sadd.s32 %s35, 1
      %s37 = scalar_select %p34, %s35, %s36
      %p40 = pneg %p34
      %p41 = scmp.eq.s32.totalorder %s13, 1
      %p42 = por %p40, %p41
      %p43 = scmp.ne.s32.totalorder %s35, %s38
      %p44 = scmp.eq.s32.totalorder %s13, 0
      %p45 = por %p43, %p44
      %p46 = scmp.ne.s32.totalorder %s35, %s38
      %p47 = scmp.eq.s32.totalorder %s18, 1
      %p48 = por %p46, %p47
      %p49 = scmp.ne.s32.totalorder %s38, %s39
      %p50 = scmp.eq.s32.totalorder %s18, 0
      %p51 = por %p49, %p50
      %p52 = scmp.ne.s32.totalorder %s38, %s39
      %p53 = scmp.eq.s32.totalorder %s19, 1
      %p54 = por %p52, %p53
      %p56 = scmp.ne.s32.totalorder %s39, %s55
      %p57 = scmp.eq.s32.totalorder %s19, 0
      %p58 = por %p56, %p57
      %s59 = ssub.s32 %s20, %s32
      %p60 = scmp.eq.s32.totalorder %s59, 0
      %s62 = sadd.s32 %s61, 1
      %s63 = scalar_select %p60, %s61, %s62
      %p66 = pneg %p60
      %p67 = scmp.eq.s32.totalorder %s13, 1
      %p68 = por %p66, %p67
      %p69 = scmp.ne.s32.totalorder %s61, %s64
      %p70 = scmp.eq.s32.totalorder %s13, 0
      %p71 = por %p69, %p70
      %p72 = scmp.ne.s32.totalorder %s61, %s64
      %p73 = scmp.eq.s32.totalorder %s18, 1
      %p74 = por %p72, %p73
      %p75 = scmp.ne.s32.totalorder %s64, %s65
      %p76 = scmp.eq.s32.totalorder %s18, 0
      %p77 = por %p75, %p76
      %p78 = scmp.ne.s32.totalorder %s64, %s65
      %p79 = scmp.eq.s32.totalorder %s19, 1
      %p80 = por %p78, %p79
      %p82 = scmp.ne.s32.totalorder %s65, %s81
      %p83 = scmp.eq.s32.totalorder %s19, 0
      %p84 = por %p82, %p83
      %s86 = sadd.s32 %s85, 1
      %p89 = scmp.eq.s32.totalorder %s13, 1
      %p90 = scmp.ne.s32.totalorder %s85, %s87
      %p91 = scmp.eq.s32.totalorder %s13, 0
      %p92 = por %p90, %p91
      %p93 = scmp.ne.s32.totalorder %s85, %s87
      %p94 = scmp.eq.s32.totalorder %s18, 1
      %p95 = por %p93, %p94
      %p96 = scmp.ne.s32.totalorder %s87, %s88
      %p97 = scmp.eq.s32.totalorder %s18, 0
      %p98 = por %p96, %p97
      %p99 = scmp.ne.s32.totalorder %s87, %s88
      %p100 = scmp.eq.s32.totalorder %s19, 1
      %p101 = por %p99, %p100
      %p103 = scmp.ne.s32.totalorder %s88, %s102
      %p104 = scmp.eq.s32.totalorder %s19, 0
      %p105 = por %p103, %p104
      %s107 = sadd.s32 %s106, 1
      %p110 = scmp.eq.s32.totalorder %s13, 1
      %p111 = scmp.ne.s32.totalorder %s106, %s108
      %p112 = scmp.eq.s32.totalorder %s13, 0
      %p113 = por %p111, %p112
      %p114 = scmp.ne.s32.totalorder %s106, %s108
      %p115 = scmp.eq.s32.totalorder %s18, 1
      %p116 = por %p114, %p115
      %p117 = scmp.ne.s32.totalorder %s108, %s109
      %p118 = scmp.eq.s32.totalorder %s18, 0
      %p119 = por %p117, %p118
      %p120 = scmp.ne.s32.totalorder %s108, %s109
      %p121 = scmp.eq.s32.totalorder %s19, 1
      %p122 = por %p120, %p121
      %p124 = scmp.ne.s32.totalorder %s109, %s123
      %p125 = scmp.eq.s32.totalorder %s19, 0
      %p126 = por %p124, %p125
      %s127 = ssub.s32 %s20, %s32
      %s128 = ssub.s32 %s21, %s28
      %s129 = sor.u32 %s127, %s128
      %p130 = scmp.eq.s32.totalorder %s129, 0
      %s132 = sadd.s32 %s131, 1
      %s133 = scalar_select %p130, %s131, %s132
      %p136 = pneg %p130
      %p137 = scmp.eq.s32.totalorder %s13, 1
      %p138 = por %p136, %p137
      %p139 = scmp.ne.s32.totalorder %s131, %s134
      %p140 = scmp.eq.s32.totalorder %s13, 0
      %p141 = por %p139, %p140
      %p142 = scmp.ne.s32.totalorder %s131, %s134
      %p143 = scmp.eq.s32.totalorder %s18, 1
      %p144 = por %p142, %p143
      %p145 = scmp.ne.s32.totalorder %s134, %s135
      %p146 = scmp.eq.s32.totalorder %s18, 0
      %p147 = por %p145, %p146
      %p148 = scmp.ne.s32.totalorder %s134, %s135
      %p149 = scmp.eq.s32.totalorder %s19, 1
      %p150 = por %p148, %p149
      %p152 = scmp.ne.s32.totalorder %s135, %s151
      %p153 = scmp.eq.s32.totalorder %s19, 0
      %p154 = por %p152, %p153
      %p155 = scmp.le.s32.totalorder 1, %s13
      %p156 = scmp.lt.s32.totalorder %s13, 3
      %p157 = pnand %p155, %p156
      %p158 = pneg %p157
      // Predicated region
      $region9: #{tpu_custom_call.1} parent=5 // pred_check
        _
      $region10: #{tpu_custom_call.1} parent=5 // pred_check_branch
        %160 = sbr.rel (%p157) target = $region12
      $region11: #{tpu_custom_call.1} parent=5 // pred_region
        %s161 = ssub.s32 %s13, 1
        // Predicated region
        $region13: #{tpu_custom_call.1} parent=11 // pred_check
          %p162 = pneg %p98
        $region14: #{tpu_custom_call.1} parent=11 // pred_check_branch
          %164 = sbr.rel (%p162) target = $region16
        $region15: #{tpu_custom_call.1} parent=11 // pred_region
          _
        $region16: #{tpu_custom_call.1} parent=11 // pred_fallthru
          _
        // Predicated region
        $region17: #{tpu_custom_call.1} parent=11 // pred_check
          %p165 = pneg %p119
        $region18: #{tpu_custom_call.1} parent=11 // pred_check_branch
          %167 = sbr.rel (%p165) target = $region20
        $region19: #{tpu_custom_call.1} parent=11 // pred_region
          _
        $region20: #{tpu_custom_call.1} parent=11 // pred_fallthru
          _
      $region12: #{tpu_custom_call.1} parent=5 // pred_fallthru
        _
      %p168 = scmp.lt.s32.totalorder %s13, 2
      // Predicated region
      $region21: #{tpu_custom_call.1} parent=5 // pred_check
        %p169 = pneg %p168
      $region22: #{tpu_custom_call.1} parent=5 // pred_check_branch
        %171 = sbr.rel (%p169) target = $region24
      $region23: #{tpu_custom_call.1} parent=5 // pred_region
        // Predicated region
        $region25: #{tpu_custom_call.1} parent=23 // pred_check
          %p172 = pneg %p45
        $region26: #{tpu_custom_call.1} parent=23 // pred_check_branch
          %174 = sbr.rel (%p172) target = $region28
        $region27: #{tpu_custom_call.1} parent=23 // pred_region
          %p175 = scmp.lt.s32.totalorder %s20, 1
          %s176 = scalar_select %p175, %s20, 1
          %s177 = smul.addr %s176, 4
          %s178 = smul.addr %s177, 4
          %s179 = scalar_lea.vmem %s0, %s178
        $region28: #{tpu_custom_call.1} parent=23 // pred_fallthru
          _
        // Predicated region
        $region29: #{tpu_custom_call.1} parent=23 // pred_check
          %p180 = pneg %p71
        $region30: #{tpu_custom_call.1} parent=23 // pred_check_branch
          %182 = sbr.rel (%p180) target = $region32
        $region31: #{tpu_custom_call.1} parent=23 // pred_region
          %p183 = scmp.lt.s32.totalorder %s20, 1
          %s184 = scalar_select %p183, %s20, 1
          %s185 = smul.addr %s184, 8
          %s186 = smul.addr %s185, 4
          %s187 = scalar_lea.vmem %s1, %s186
        $region32: #{tpu_custom_call.1} parent=23 // pred_fallthru
          _
      $region24: #{tpu_custom_call.1} parent=5 // pred_fallthru
        _
      %p188 = scmp.le.s32.totalorder 1, %s13
      %p189 = scmp.lt.s32.totalorder %s13, 3
      %p190 = pnand %p188, %p189
      %p191 = pneg %p190
      // Predicated region
      $region33: #{tpu_custom_call.1} parent=5 // pred_check
        _
      $region34: #{tpu_custom_call.1} parent=5 // pred_check_branch
        %193 = sbr.rel (%p190) target = $region36
      $region35: #{tpu_custom_call.1} parent=5 // pred_region
        %s194 = ssub.s32 %s13, 1
        %p195 = scmp.lt.s32.totalorder %s22, 1
        %s196 = scalar_select %p195, %s22, 1
        %s197 = smul.addr %s196, 4
        %s198 = smul.addr %s197, 4
        %s199 = scalar_lea.vmem %s0, %s198
        %p200 = pneg %p51
        %p201 = pneg %p48
        %p202 = scmp.lt.s32.totalorder %s22, 1
        %s203 = scalar_select %p202, %s22, 1
        %s204 = smul.addr %s203, 8
        %s205 = smul.addr %s204, 4
        %s206 = scalar_lea.vmem %s1, %s205
        %p207 = pneg %p77
        %p208 = pneg %p74
        %p209 = pneg %p98
        %p210 = pneg %p95
        %p211 = pneg %p119
        %p212 = pneg %p116
        %p213 = pneg %p147
        %p214 = pneg %p144
        %s215 = sand.u32 %s134, 1
        %s216 = scalar_lea.sflag [#allocation3], %s215
        %s217 = sand.u32 %s134, 1
        %s218 = smul.addr %s217, 64
        %s219 = scalar_lea.vmem [#allocation2], %s218
        %p220 = scmp.lt.s32.totalorder %s22, 1
        %s221 = scalar_select %p220, %s22, 1
        %s222 = smul.addr %s221, 4
        %s223 = smul.addr %s222, 4
        %s224 = scalar_lea.vmem %s0, %s223
        %p225 = scmp.lt.s32.totalorder %s22, 1
        %s226 = scalar_select %p225, %s22, 1
        %s227 = smul.addr %s226, 8
        %s228 = smul.addr %s227, 4
        %s229 = scalar_lea.vmem %s1, %s228
        %s230 = smul.u32 8, %s23
        %s232 = smul.u32 %s23, 8
        %v233 = vld [vmem:[%s224] sm:$0xf]
        %v234 = vunpack.c.l.bf16 %v233
        %s235 = sshra.s32 %s232, 3
        %s236 = sand.u32 %s232, 7
        %s237 = smul.addr %s235, 4
        %s238 = scalar_lea.vmem %s224, %s237
        %v239 = vld [vmem:[%s238] sm:$0xf]
        %v240 = vunpack.c.l.bf16 %v239
        %v242 = vcombine.high %v240, %v240
        %v244 = vunpack.c.l.s4 1966171168
        %v245 = vunpack.c.0.s8 %v244
        %v246 = vlaneseq
        %v247 = vshrl.u32 %v246, 7
        %v248 = vsub.s32 %v245, %v247
        %v249 = vrot.slane %v240, %v248
        %v251 = vunpack.c.l.s4 1966171168
        %v252 = vunpack.c.0.s8 %v251
        %v253 = vlaneseq
        %v254 = vshrl.u32 %v253, 7
        %v255 = vsub.s32 %v252, %v254
        %v256 = vrot.slane %v242, %v255
        %v257 = vcombine.high %v249, %v249
        %v258 = vcombine.high %v256, %v256
        %v260 = vunpack.c.l.s4 1966171168
        %v261 = vunpack.c.0.s8 %v260
        %v262 = vlaneseq
        %v263 = vshrl.u32 %v262, 7
        %v264 = vsub.s32 %v261, %v263
        %v265 = vrot.slane %v249, %v264
        %v267 = vunpack.c.l.s4 1966171168
        %v268 = vunpack.c.0.s8 %v267
        %v269 = vlaneseq
        %v270 = vshrl.u32 %v269, 7
        %v271 = vsub.s32 %v268, %v270
        %v272 = vrot.slane %v256, %v271
        %v274 = vunpack.c.l.s4 1966171168
        %v275 = vunpack.c.0.s8 %v274
        %v276 = vlaneseq
        %v277 = vshrl.u32 %v276, 7
        %v278 = vsub.s32 %v275, %v277
        %v279 = vrot.slane %v257, %v278
        %v281 = vunpack.c.l.s4 1966171168
        %v282 = vunpack.c.0.s8 %v281
        %v283 = vlaneseq
        %v284 = vshrl.u32 %v283, 7
        %v285 = vsub.s32 %v282, %v284
        %v286 = vrot.slane %v258, %v285
        %v287 = vcombine.high %v265, %v265
        %v288 = vcombine.high %v272, %v272
        %v289 = vcombine.high %v279, %v279
        %v290 = vcombine.high %v286, %v286
        %v291 = vlaneseq
        %v292 = vshrl.u32 %v291, 7
        %v293 = vsub.s32 0, %v292
        %v294 = vrot.slane %v265, %v293
        %v295 = vlaneseq
        %v296 = vshrl.u32 %v295, 7
        %v297 = vsub.s32 0, %v296
        %v298 = vrot.slane %v279, %v297
        %v299 = vlaneseq
        %v300 = vshrl.u32 %v299, 7
        %v301 = vsub.s32 0, %v300
        %v302 = vrot.slane %v287, %v301
        %v303 = vlaneseq
        %v304 = vshrl.u32 %v303, 7
        %v305 = vsub.s32 0, %v304
        %v306 = vrot.slane %v289, %v305
        %v307 = vlaneseq
        %v308 = vshrl.u32 %v307, 7
        %v309 = vsub.s32 0, %v308
        %v310 = vrot.slane %v272, %v309
        %v311 = vlaneseq
        %v312 = vshrl.u32 %v311, 7
        %v313 = vsub.s32 0, %v312
        %v314 = vrot.slane %v286, %v313
        %v315 = vlaneseq
        %v316 = vshrl.u32 %v315, 7
        %v317 = vsub.s32 0, %v316
        %v318 = vrot.slane %v288, %v317
        %v319 = vlaneseq
        %v320 = vshrl.u32 %v319, 7
        %v321 = vsub.s32 0, %v320
        %v322 = vrot.slane %v290, %v321
        %v331 = vmul.f32 %v294, %v234
        %v332 = vmul.f32 %v298, %v234
        %v333 = vmul.f32 %v302, %v234
        %v334 = vmul.f32 %v306, %v234
        %v335 = vmul.f32 %v310, %v234
        %v336 = vmul.f32 %v314, %v234
        %v337 = vmul.f32 %v318, %v234
        %v338 = vmul.f32 %v322, %v234
        %v339 = vadd.f32 %v331, 0.0
        %v340 = vadd.f32 %v332, 0.0
        %v341 = vadd.f32 %v333, 0.0
        %v342 = vadd.f32 %v334, 0.0
        %v343 = vadd.f32 %v335, 0.0
        %v344 = vadd.f32 %v336, 0.0
        %v345 = vadd.f32 %v337, 0.0
        %v346 = vadd.f32 %v338, 0.0
        %s347 = scalar_lea.vmem %s224, 4
        %v348 = vld [vmem:[%s347] sm:$0xf]
        %v349 = vunpack.c.l.bf16 %v348
        %s350 = sadd.s32 %s235, 1
        %s351 = smul.addr %s350, 4
        %s352 = scalar_lea.vmem %s224, %s351
        %v353 = vld [vmem:[%s352] sm:$0xf]
        %v354 = vunpack.c.l.bf16 %v353
        %v356 = vcombine.high %v354, %v354
        %v358 = vunpack.c.l.s4 1966171168
        %v359 = vunpack.c.0.s8 %v358
        %v360 = vlaneseq
        %v361 = vshrl.u32 %v360, 7
        %v362 = vsub.s32 %v359, %v361
        %v363 = vrot.slane %v354, %v362
        %v365 = vunpack.c.l.s4 1966171168
        %v366 = vunpack.c.0.s8 %v365
        %v367 = vlaneseq
        %v368 = vshrl.u32 %v367, 7
        %v369 = vsub.s32 %v366, %v368
        %v370 = vrot.slane %v356, %v369
        %v371 = vcombine.high %v363, %v363
        %v372 = vcombine.high %v370, %v370
        %v374 = vunpack.c.l.s4 1966171168
        %v375 = vunpack.c.0.s8 %v374
        %v376 = vlaneseq
        %v377 = vshrl.u32 %v376, 7
        %v378 = vsub.s32 %v375, %v377
        %v379 = vrot.slane %v363, %v378
        %v381 = vunpack.c.l.s4 1966171168
        %v382 = vunpack.c.0.s8 %v381
        %v383 = vlaneseq
        %v384 = vshrl.u32 %v383, 7
        %v385 = vsub.s32 %v382, %v384
        %v386 = vrot.slane %v370, %v385
        %v388 = vunpack.c.l.s4 1966171168
        %v389 = vunpack.c.0.s8 %v388
        %v390 = vlaneseq
        %v391 = vshrl.u32 %v390, 7
        %v392 = vsub.s32 %v389, %v391
        %v393 = vrot.slane %v371, %v392
        %v395 = vunpack.c.l.s4 1966171168
        %v396 = vunpack.c.0.s8 %v395
        %v397 = vlaneseq
        %v398 = vshrl.u32 %v397, 7
        %v399 = vsub.s32 %v396, %v398
        %v400 = vrot.slane %v372, %v399
        %v401 = vcombine.high %v379, %v379
        %v402 = vcombine.high %v386, %v386
        %v403 = vcombine.high %v393, %v393
        %v404 = vcombine.high %v400, %v400
        %v405 = vlaneseq
        %v406 = vshrl.u32 %v405, 7
        %v407 = vsub.s32 0, %v406
        %v408 = vrot.slane %v379, %v407
        %v409 = vlaneseq
        %v410 = vshrl.u32 %v409, 7
        %v411 = vsub.s32 0, %v410
        %v412 = vrot.slane %v393, %v411
        %v413 = vlaneseq
        %v414 = vshrl.u32 %v413, 7
        %v415 = vsub.s32 0, %v414
        %v416 = vrot.slane %v401, %v415
        %v417 = vlaneseq
        %v418 = vshrl.u32 %v417, 7
        %v419 = vsub.s32 0, %v418
        %v420 = vrot.slane %v403, %v419
        %v421 = vlaneseq
        %v422 = vshrl.u32 %v421, 7
        %v423 = vsub.s32 0, %v422
        %v424 = vrot.slane %v386, %v423
        %v425 = vlaneseq
        %v426 = vshrl.u32 %v425, 7
        %v427 = vsub.s32 0, %v426
        %v428 = vrot.slane %v400, %v427
        %v429 = vlaneseq
        %v430 = vshrl.u32 %v429, 7
        %v431 = vsub.s32 0, %v430
        %v432 = vrot.slane %v402, %v431
        %v433 = vlaneseq
        %v434 = vshrl.u32 %v433, 7
        %v435 = vsub.s32 0, %v434
        %v436 = vrot.slane %v404, %v435
        %v445 = vmul.f32 %v408, %v349
        %v446 = vmul.f32 %v412, %v349
        %v447 = vmul.f32 %v416, %v349
        %v448 = vmul.f32 %v420, %v349
        %v449 = vmul.f32 %v424, %v349
        %v450 = vmul.f32 %v428, %v349
        %v451 = vmul.f32 %v432, %v349
        %v452 = vmul.f32 %v436, %v349
        %v453 = vadd.f32 %v339, %v445
        %v454 = vadd.f32 %v340, %v446
        %v455 = vadd.f32 %v341, %v447
        %v456 = vadd.f32 %v342, %v448
        %v457 = vadd.f32 %v343, %v449
        %v458 = vadd.f32 %v344, %v450
        %v459 = vadd.f32 %v345, %v451
        %v460 = vadd.f32 %v346, %v452
        %s461 = scalar_lea.vmem %s224, 8
        %v462 = vld [vmem:[%s461] sm:$0xf]
        %v463 = vunpack.c.l.bf16 %v462
        %s464 = sadd.s32 %s235, 2
        %s465 = smul.addr %s464, 4
        %s466 = scalar_lea.vmem %s224, %s465
        %v467 = vld [vmem:[%s466] sm:$0xf]
        %v468 = vunpack.c.l.bf16 %v467
        %v470 = vcombine.high %v468, %v468
        %v472 = vunpack.c.l.s4 1966171168
        %v473 = vunpack.c.0.s8 %v472
        %v474 = vlaneseq
        %v475 = vshrl.u32 %v474, 7
        %v476 = vsub.s32 %v473, %v475
        %v477 = vrot.slane %v468, %v476
        %v479 = vunpack.c.l.s4 1966171168
        %v480 = vunpack.c.0.s8 %v479
        %v481 = vlaneseq
        %v482 = vshrl.u32 %v481, 7
        %v483 = vsub.s32 %v480, %v482
        %v484 = vrot.slane %v470, %v483
        %v485 = vcombine.high %v477, %v477
        %v486 = vcombine.high %v484, %v484
        %v488 = vunpack.c.l.s4 1966171168
        %v489 = vunpack.c.0.s8 %v488
        %v490 = vlaneseq
        %v491 = vshrl.u32 %v490, 7
        %v492 = vsub.s32 %v489, %v491
        %v493 = vrot.slane %v477, %v492
        %v495 = vunpack.c.l.s4 1966171168
        %v496 = vunpack.c.0.s8 %v495
        %v497 = vlaneseq
        %v498 = vshrl.u32 %v497, 7
        %v499 = vsub.s32 %v496, %v498
        %v500 = vrot.slane %v484, %v499
        %v502 = vunpack.c.l.s4 1966171168
        %v503 = vunpack.c.0.s8 %v502
        %v504 = vlaneseq
        %v505 = vshrl.u32 %v504, 7
        %v506 = vsub.s32 %v503, %v505
        %v507 = vrot.slane %v485, %v506
        %v509 = vunpack.c.l.s4 1966171168
        %v510 = vunpack.c.0.s8 %v509
        %v511 = vlaneseq
        %v512 = vshrl.u32 %v511, 7
        %v513 = vsub.s32 %v510, %v512
        %v514 = vrot.slane %v486, %v513
        %v515 = vcombine.high %v493, %v493
        %v516 = vcombine.high %v500, %v500
        %v517 = vcombine.high %v507, %v507
        %v518 = vcombine.high %v514, %v514
        %v519 = vlaneseq
        %v520 = vshrl.u32 %v519, 7
        %v521 = vsub.s32 0, %v520
        %v522 = vrot.slane %v493, %v521
        %v523 = vlaneseq
        %v524 = vshrl.u32 %v523, 7
        %v525 = vsub.s32 0, %v524
        %v526 = vrot.slane %v507, %v525
        %v527 = vlaneseq
        %v528 = vshrl.u32 %v527, 7
        %v529 = vsub.s32 0, %v528
        %v530 = vrot.slane %v515, %v529
        %v531 = vlaneseq
        %v532 = vshrl.u32 %v531, 7
        %v533 = vsub.s32 0, %v532
        %v534 = vrot.slane %v517, %v533
        %v535 = vlaneseq
        %v536 = vshrl.u32 %v535, 7
        %v537 = vsub.s32 0, %v536
        %v538 = vrot.slane %v500, %v537
        %v539 = vlaneseq
        %v540 = vshrl.u32 %v539, 7
        %v541 = vsub.s32 0, %v540
        %v542 = vrot.slane %v514, %v541
        %v543 = vlaneseq
        %v544 = vshrl.u32 %v543, 7
        %v545 = vsub.s32 0, %v544
        %v546 = vrot.slane %v516, %v545
        %v547 = vlaneseq
        %v548 = vshrl.u32 %v547, 7
        %v549 = vsub.s32 0, %v548
        %v550 = vrot.slane %v518, %v549
        %v559 = vmul.f32 %v522, %v463
        %v560 = vmul.f32 %v526, %v463
        %v561 = vmul.f32 %v530, %v463
        %v562 = vmul.f32 %v534, %v463
        %v563 = vmul.f32 %v538, %v463
        %v564 = vmul.f32 %v542, %v463
        %v565 = vmul.f32 %v546, %v463
        %v566 = vmul.f32 %v550, %v463
        %v567 = vadd.f32 %v453, %v559
        %v568 = vadd.f32 %v454, %v560
        %v569 = vadd.f32 %v455, %v561
        %v570 = vadd.f32 %v456, %v562
        %v571 = vadd.f32 %v457, %v563
        %v572 = vadd.f32 %v458, %v564
        %v573 = vadd.f32 %v459, %v565
        %v574 = vadd.f32 %v460, %v566
        %s575 = scalar_lea.vmem %s224, 12
        %v576 = vld [vmem:[%s575] sm:$0xf]
        %v577 = vunpack.c.l.bf16 %v576
        %s578 = sadd.s32 %s235, 3
        %s579 = smul.addr %s578, 4
        %s580 = scalar_lea.vmem %s224, %s579
        %v581 = vld [vmem:[%s580] sm:$0xf]
        %v582 = vunpack.c.l.bf16 %v581
        %v584 = vcombine.high %v582, %v582
        %v586 = vunpack.c.l.s4 1966171168
        %v587 = vunpack.c.0.s8 %v586
        %v588 = vlaneseq
        %v589 = vshrl.u32 %v588, 7
        %v590 = vsub.s32 %v587, %v589
        %v591 = vrot.slane %v582, %v590
        %v593 = vunpack.c.l.s4 1966171168
        %v594 = vunpack.c.0.s8 %v593
        %v595 = vlaneseq
        %v596 = vshrl.u32 %v595, 7
        %v597 = vsub.s32 %v594, %v596
        %v598 = vrot.slane %v584, %v597
        %v599 = vcombine.high %v591, %v591
        %v600 = vcombine.high %v598, %v598
        %v602 = vunpack.c.l.s4 1966171168
        %v603 = vunpack.c.0.s8 %v602
        %v604 = vlaneseq
        %v605 = vshrl.u32 %v604, 7
        %v606 = vsub.s32 %v603, %v605
        %v607 = vrot.slane %v591, %v606
        %v609 = vunpack.c.l.s4 1966171168
        %v610 = vunpack.c.0.s8 %v609
        %v611 = vlaneseq
        %v612 = vshrl.u32 %v611, 7
        %v613 = vsub.s32 %v610, %v612
        %v614 = vrot.slane %v598, %v613
        %v616 = vunpack.c.l.s4 1966171168
        %v617 = vunpack.c.0.s8 %v616
        %v618 = vlaneseq
        %v619 = vshrl.u32 %v618, 7
        %v620 = vsub.s32 %v617, %v619
        %v621 = vrot.slane %v599, %v620
        %v623 = vunpack.c.l.s4 1966171168
        %v624 = vunpack.c.0.s8 %v623
        %v625 = vlaneseq
        %v626 = vshrl.u32 %v625, 7
        %v627 = vsub.s32 %v624, %v626
        %v628 = vrot.slane %v600, %v627
        %v629 = vcombine.high %v607, %v607
        %v630 = vcombine.high %v614, %v614
        %v631 = vcombine.high %v621, %v621
        %v632 = vcombine.high %v628, %v628
        %v633 = vlaneseq
        %v634 = vshrl.u32 %v633, 7
        %v635 = vsub.s32 0, %v634
        %v636 = vrot.slane %v607, %v635
        %v637 = vlaneseq
        %v638 = vshrl.u32 %v637, 7
        %v639 = vsub.s32 0, %v638
        %v640 = vrot.slane %v621, %v639
        %v641 = vlaneseq
        %v642 = vshrl.u32 %v641, 7
        %v643 = vsub.s32 0, %v642
        %v644 = vrot.slane %v629, %v643
        %v645 = vlaneseq
        %v646 = vshrl.u32 %v645, 7
        %v647 = vsub.s32 0, %v646
        %v648 = vrot.slane %v631, %v647
        %v649 = vlaneseq
        %v650 = vshrl.u32 %v649, 7
        %v651 = vsub.s32 0, %v650
        %v652 = vrot.slane %v614, %v651
        %v653 = vlaneseq
        %v654 = vshrl.u32 %v653, 7
        %v655 = vsub.s32 0, %v654
        %v656 = vrot.slane %v628, %v655
        %v657 = vlaneseq
        %v658 = vshrl.u32 %v657, 7
        %v659 = vsub.s32 0, %v658
        %v660 = vrot.slane %v630, %v659
        %v661 = vlaneseq
        %v662 = vshrl.u32 %v661, 7
        %v663 = vsub.s32 0, %v662
        %v664 = vrot.slane %v632, %v663
        %v673 = vmul.f32 %v636, %v577
        %v674 = vmul.f32 %v640, %v577
        %v675 = vmul.f32 %v644, %v577
        %v676 = vmul.f32 %v648, %v577
        %v677 = vmul.f32 %v652, %v577
        %v678 = vmul.f32 %v656, %v577
        %v679 = vmul.f32 %v660, %v577
        %v680 = vmul.f32 %v664, %v577
        %v681 = vadd.f32 %v567, %v673
        %v682 = vadd.f32 %v568, %v674
        %v683 = vadd.f32 %v569, %v675
        %v684 = vadd.f32 %v570, %v676
        %v685 = vadd.f32 %v571, %v677
        %v686 = vadd.f32 %v572, %v678
        %v687 = vadd.f32 %v573, %v679
        %v688 = vadd.f32 %v574, %v680
        %vm689 = vcmask 523264
        %v690 = vsel %vm689, %v681, 0.0
        %691 = vadd.xlane.f32.xlu0 %v690
        %v692 = vpop.xlane.xlu0 %691
        %v693 = vsel %vm689, %v682, 0.0
        %694 = vadd.xlane.f32.xlu0 %v693
        %v695 = vpop.xlane.xlu0 %694
        %v696 = vsel %vm689, %v683, 0.0
        %697 = vadd.xlane.f32.xlu0 %v696
        %v698 = vpop.xlane.xlu0 %697
        %v699 = vsel %vm689, %v684, 0.0
        %700 = vadd.xlane.f32.xlu0 %v699
        %v701 = vpop.xlane.xlu0 %700
        %v702 = vsel %vm689, %v685, 0.0
        %703 = vadd.xlane.f32.xlu0 %v702
        %v704 = vpop.xlane.xlu0 %703
        %v705 = vsel %vm689, %v686, 0.0
        %706 = vadd.xlane.f32.xlu0 %v705
        %v707 = vpop.xlane.xlu0 %706
        %v708 = vsel %vm689, %v687, 0.0
        %709 = vadd.xlane.f32.xlu0 %v708
        %v710 = vpop.xlane.xlu0 %709
        %v711 = vsel %vm689, %v688, 0.0
        %712 = vadd.xlane.f32.xlu0 %v711
        %v713 = vpop.xlane.xlu0 %712
        %v714 = vadd.f32 %v692, 4e-05
        %v715 = vadd.f32 %v695, 4e-05
        %v716 = vadd.f32 %v698, 4e-05
        %v717 = vadd.f32 %v701, 4e-05
        %v718 = vadd.f32 %v704, 4e-05
        %v719 = vadd.f32 %v707, 4e-05
        %v720 = vadd.f32 %v710, 4e-05
        %v721 = vadd.f32 %v713, 4e-05
        %v722 = vrcp.pop %v714
        %v723 = vrcp.pop %v715
        %v724 = vrcp.pop %v716
        %v725 = vrcp.pop %v717
        %v726 = vrcp.pop %v718
        %v727 = vrcp.pop %v719
        %v728 = vrcp.pop %v720
        %v729 = vrcp.pop %v721
        %v730 = vmul.f32 %v681, %v722
        %v731 = vmul.f32 %v682, %v723
        %v732 = vmul.f32 %v683, %v724
        %v733 = vmul.f32 %v684, %v725
        %v734 = vmul.f32 %v685, %v726
        %v735 = vmul.f32 %v686, %v727
        %v736 = vmul.f32 %v687, %v728
        %v737 = vmul.f32 %v688, %v729
        %v738 = vpack.c.bf16 %v731, %v730
        %v739 = vpack.c.bf16 %v733, %v732
        %v740 = vpack.c.bf16 %v735, %v734
        %v741 = vpack.c.bf16 %v737, %v736
        %v742 = vld [vmem:[%s229] sm:$0xf]
        %v743 = vld [vmem:[%s229 + $0x4] sm:$0xf]
        %v744 = vld [vmem:[%s229 + $0x8] sm:$0xf]
        %v745 = vld [vmem:[%s229 + $0xc] sm:$0xf]
        %v746 = vld [vmem:[%s229 + $0x10] sm:$0xf]
        %v747 = vld [vmem:[%s229 + $0x14] sm:$0xf]
        %v748 = vld [vmem:[%s229 + $0x18] sm:$0xf]
        %v749 = vld [vmem:[%s229 + $0x1c] sm:$0xf]
        %v758 = vunpack.c.l.b16 %v742
        %v759 = vunpack.c.l.b16 %v743
        %v760 = vunpack.c.l.b16 %v744
        %v761 = vunpack.c.l.b16 %v745
        %v762 = vunpack.c.l.b16 %v746
        %v763 = vunpack.c.l.b16 %v747
        %v764 = vunpack.c.l.b16 %v748
        %v765 = vunpack.c.l.b16 %v749
        %v766 = vpack.c.b16 %v759, %v758
        %v767 = vpack.c.b16 %v761, %v760
        %v768 = vpack.c.b16 %v763, %v762
        %v769 = vpack.c.b16 %v765, %v764
        %v775 = vsel %vm689, %v738, 0
        %v778 = vsel %vm689, %v739, 0
        %v781 = vsel %vm689, %v740, 0
        %v784 = vsel %vm689, %v741, 0
        %786 = vmatprep.subr.bf16.mxu0 0
        %787 = vmatpush1.bf16.msra.mxu0 %v766
        %788 = vmatprep.subr.bf16.mxu0 0
        %789 = vmatpush1.bf16.msra.mxu0 %v767
        %790 = vmatprep.subr.bf16.mxu0 0
        %791 = vmatpush1.bf16.msra.mxu0 %v768
        %792 = vmatprep.subr.bf16.mxu0 0
        %793 = vmatpush1.bf16.msra.mxu0 %v769
        %794 = vmatprep.subr.bf16.mxu0 0
        %795 = vmatpush1.bf16.msra.mxu0 0
        %796 = vmatprep.subr.bf16.mxu0 0
        %797 = vmatpush1.bf16.msra.mxu0 0
        %798 = vmatprep.subr.bf16.mxu0 0
        %799 = vmatpush1.bf16.msra.mxu0 0
        %800 = vmatprep.subr.bf16.mxu0 0
        %801 = vmatpush1.bf16.msra.mxu0 0
        %802 = vmatprep.subr.bf16.mxu0 0
        %803 = vmatpush1.bf16.msra.mxu0 0
        %804 = vmatprep.subr.bf16.mxu0 0
        %805 = vmatpush1.bf16.msra.mxu0 0
        %806 = vmatprep.subr.bf16.mxu0 0
        %807 = vmatpush1.bf16.msra.mxu0 0
        %808 = vmatprep.subr.bf16.mxu0 0
        %809 = vmatpush1.bf16.msra.mxu0 0
        %810 = vmatprep.subr.bf16.mxu0 0
        %811 = vmatpush1.bf16.msra.mxu0 0
        %812 = vmatprep.subr.bf16.mxu0 0
        %813 = vmatpush1.bf16.msra.mxu0 0
        %814 = vmatprep.subr.bf16.mxu0 0
        %815 = vmatpush1.bf16.msra.mxu0 0
        %816 = vmatprep.subr.bf16.mxu0 0
        %817 = vmatpush1.bf16.msra.mxu0 0
        %818 = vmatprep.mubr.bf16.mxu0 0
        %819 = vmatmul.mubr.bf16.gmra.mrb[0].mxu0 %v775
        %v820 = vpop.f32.mrb[0].mxu0
        %v821 = vadd.f32 0.0, %v820
        %v822 = vpop.f32.mrb[0].mxu0
        %v823 = vpop.f32.mrb[0].mxu0
        %v824 = vadd.f32 0.0, %v823
        %v825 = vpop.f32.mrb[0].mxu0
        %826 = vmatprep.mubr.bf16.mxu0 0
        %827 = vmatmul.mubr.bf16.gmra.mrb[0].mxu0 %v778
        %v828 = vpop.f32.mrb[0].mxu0
        %v829 = vadd.f32 0.0, %v828
        %v830 = vpop.f32.mrb[0].mxu0
        %v831 = vpop.f32.mrb[0].mxu0
        %v832 = vadd.f32 0.0, %v831
        %v833 = vpop.f32.mrb[0].mxu0
        %834 = vmatprep.mubr.bf16.mxu0 0
        %835 = vmatmul.mubr.bf16.gmra.mrb[0].mxu0 %v781
        %v836 = vpop.f32.mrb[0].mxu0
        %v837 = vadd.f32 0.0, %v836
        %v838 = vpop.f32.mrb[0].mxu0
        %v839 = vpop.f32.mrb[0].mxu0
        %v840 = vadd.f32 0.0, %v839
        %v841 = vpop.f32.mrb[0].mxu0
        %842 = vmatprep.mubr.bf16.mxu0 0
        %843 = vmatmul.mubr.bf16.gmra.mrb[0].mxu0 %v784
        %v844 = vpop.f32.mrb[0].mxu0
        %v845 = vadd.f32 0.0, %v844
        %v846 = vpop.f32.mrb[0].mxu0
        %v847 = vpop.f32.mrb[0].mxu0
        %v848 = vadd.f32 0.0, %v847
        %v849 = vpop.f32.mrb[0].mxu0
        %850 = vdwg.mxu0
        %v851 = vpack.c.bf16 %v824, %v821
        %v852 = vpack.c.bf16 %v832, %v829
        %v853 = vpack.c.bf16 %v840, %v837
        %v854 = vpack.c.bf16 %v848, %v845
        %v855 = vld [vmem:[%s2] sm:$0xff]
        %v856 = vld [vmem:[%s2 + $0x8] sm:$0xff]
        %v857 = vld [vmem:[%s2 + $0x10] sm:$0xff]
        %v858 = vld [vmem:[%s2 + $0x18] sm:$0xff]
        %v859 = vld [vmem:[%s3] sm:$0x3]
        %v861 = vlaneseq
        %v862 = vshrl.u32 %v861, 7
        %v863 = vsub.s32 0, %v862
        %v864 = vrot.slane %v859, %v863
        %v865 = vlaneseq
        %v866 = vshrl.u32 %v865, 7
        %v867 = vsub.s32 1, %v866
        %v868 = vrot.slane %v859, %v867
        %v875 = vunpack.c.l.b16 %v855
        %v876 = vunpack.c.h.b16 %v855
        %v877 = vunpack.c.l.b16 %v856
        %v878 = vunpack.c.h.b16 %v856
        %v879 = vunpack.c.l.b16 %v857
        %v880 = vunpack.c.h.b16 %v857
        %v881 = vunpack.c.l.b16 %v858
        %v882 = vunpack.c.h.b16 %v858
        %v883 = vpack.c.b16 %v877, %v875
        %v884 = vpack.c.b16 %v878, %v876
        %v885 = vpack.c.b16 %v881, %v879
        %v886 = vpack.c.b16 %v882, %v880
        %vm891 = vcmask 261120
        %v893 = vsel %vm891, %v851, 0
        %v896 = vsel %vm891, %v852, 0
        %v899 = vsel %vm891, %v853, 0
        %v902 = vsel %vm891, %v854, 0
        %904 = vmatprep.subr.bf16.mxu0 %v884
        %905 = vmatpush1.bf16.msra.mxu0 %v883
        %906 = vmatprep.subr.bf16.mxu0 %v886
        %907 = vmatpush1.bf16.msra.mxu0 %v885
        %908 = vmatprep.subr.bf16.mxu0 0
        %909 = vmatpush1.bf16.msra.mxu0 0
        %910 = vmatprep.subr.bf16.mxu0 0
        %911 = vmatpush1.bf16.msra.mxu0 0
        %912 = vmatprep.subr.bf16.mxu0 0
        %913 = vmatpush1.bf16.msra.mxu0 0
        %914 = vmatprep.subr.bf16.mxu0 0
        %915 = vmatpush1.bf16.msra.mxu0 0
        %916 = vmatprep.subr.bf16.mxu0 0
        %917 = vmatpush1.bf16.msra.mxu0 0
        %918 = vmatprep.subr.bf16.mxu0 0
        %919 = vmatpush1.bf16.msra.mxu0 0
        %920 = vmatprep.subr.bf16.mxu0 0
        %921 = vmatpush1.bf16.msra.mxu0 0
        %922 = vmatprep.subr.bf16.mxu0 0
        %923 = vmatpush1.bf16.msra.mxu0 0
        %924 = vmatprep.subr.bf16.mxu0 0
        %925 = vmatpush1.bf16.msra.mxu0 0
        %926 = vmatprep.subr.bf16.mxu0 0
        %927 = vmatpush1.bf16.msra.mxu0 0
        %928 = vmatprep.subr.bf16.mxu0 0
        %929 = vmatpush1.bf16.msra.mxu0 0
        %930 = vmatprep.subr.bf16.mxu0 0
        %931 = vmatpush1.bf16.msra.mxu0 0
        %932 = vmatprep.subr.bf16.mxu0 0
        %933 = vmatpush1.bf16.msra.mxu0 0
        %934 = vmatprep.subr.bf16.mxu0 0
        %935 = vmatpush1.bf16.msra.mxu0 0
        %936 = vmatprep.mubr.bf16.mxu0 0
        %937 = vmatmul.mubr.bf16.gmra.mrb[0].mxu0 %v893
        %v938 = vpop.f32.mrb[0].mxu0
        %v939 = vadd.f32 %v864, %v938
        %v940 = vpop.f32.mrb[0].mxu0
        %v941 = vadd.f32 %v868, %v940
        %v942 = vpop.f32.mrb[0].mxu0
        %v943 = vadd.f32 %v864, %v942
        %v944 = vpop.f32.mrb[0].mxu0
        %v945 = vadd.f32 %v868, %v944
        %946 = vmatprep.mubr.bf16.mxu0 0
        %947 = vmatmul.mubr.bf16.gmra.mrb[0].mxu0 %v896
        %v948 = vpop.f32.mrb[0].mxu0
        %v949 = vadd.f32 %v864, %v948
        %v950 = vpop.f32.mrb[0].mxu0
        %v951 = vadd.f32 %v868, %v950
        %v952 = vpop.f32.mrb[0].mxu0
        %v953 = vadd.f32 %v864, %v952
        %v954 = vpop.f32.mrb[0].mxu0
        %v955 = vadd.f32 %v868, %v954
        %956 = vmatprep.mubr.bf16.mxu0 0
        %957 = vmatmul.mubr.bf16.gmra.mrb[0].mxu0 %v899
        %v958 = vpop.f32.mrb[0].mxu0
        %v959 = vadd.f32 %v864, %v958
        %v960 = vpop.f32.mrb[0].mxu0
        %v961 = vadd.f32 %v868, %v960
        %v962 = vpop.f32.mrb[0].mxu0
        %v963 = vadd.f32 %v864, %v962
        %v964 = vpop.f32.mrb[0].mxu0
        %v965 = vadd.f32 %v868, %v964
        %966 = vmatprep.mubr.bf16.mxu0 0
        %967 = vmatmul.mubr.bf16.gmra.mrb[0].mxu0 %v902
        %v968 = vpop.f32.mrb[0].mxu0
        %v969 = vadd.f32 %v864, %v968
        %v970 = vpop.f32.mrb[0].mxu0
        %v971 = vadd.f32 %v868, %v970
        %v972 = vpop.f32.mrb[0].mxu0
        %v973 = vadd.f32 %v864, %v972
        %v974 = vpop.f32.mrb[0].mxu0
        %v975 = vadd.f32 %v868, %v974
        %976 = vdwg.mxu0
        %v977 = vpack.c.bf16 %v939, %v939
        %v978 = vpack.c.bf16 %v941, %v941
        %v979 = vpack.c.bf16 %v943, %v943
        %v980 = vpack.c.bf16 %v945, %v945
        %v981 = vpack.c.bf16 %v949, %v949
        %v982 = vpack.c.bf16 %v951, %v951
        %v983 = vpack.c.bf16 %v953, %v953
        %v984 = vpack.c.bf16 %v955, %v955
        %v985 = vpack.c.bf16 %v959, %v959
        %v986 = vpack.c.bf16 %v961, %v961
        %v987 = vpack.c.bf16 %v963, %v963
        %v988 = vpack.c.bf16 %v965, %v965
        %v989 = vpack.c.bf16 %v969, %v969
        %v990 = vpack.c.bf16 %v971, %v971
        %v991 = vpack.c.bf16 %v973, %v973
        %v992 = vpack.c.bf16 %v975, %v975
        %v1009 = vunpack.c.l.b16 %v977
        %v1010 = vunpack.c.l.b16 %v978
        %v1011 = vunpack.c.l.b16 %v979
        %v1012 = vunpack.c.l.b16 %v980
        %v1013 = vunpack.c.l.b16 %v981
        %v1014 = vunpack.c.l.b16 %v982
        %v1015 = vunpack.c.l.b16 %v983
        %v1016 = vunpack.c.l.b16 %v984
        %v1017 = vunpack.c.l.b16 %v985
        %v1018 = vunpack.c.l.b16 %v986
        %v1019 = vunpack.c.l.b16 %v987
        %v1020 = vunpack.c.l.b16 %v988
        %v1021 = vunpack.c.l.b16 %v989
        %v1022 = vunpack.c.l.b16 %v990
        %v1023 = vunpack.c.l.b16 %v991
        %v1024 = vunpack.c.l.b16 %v992
        %v1025 = vpack.c.b16 %v1010, %v1009
        %v1026 = vpack.c.b16 %v1012, %v1011
        %v1027 = vpack.c.b16 %v1014, %v1013
        %v1028 = vpack.c.b16 %v1016, %v1015
        %v1029 = vpack.c.b16 %v1018, %v1017
        %v1030 = vpack.c.b16 %v1020, %v1019
        %v1031 = vpack.c.b16 %v1022, %v1021
        %v1032 = vpack.c.b16 %v1024, %v1023
        %1041 = vst [vmem:[%s219] sm:$0xff] %v1025
        %1042 = vst [vmem:[%s219 + $0x8] sm:$0xff] %v1026
        %1043 = vst [vmem:[%s219 + $0x10] sm:$0xff] %v1027
        %1044 = vst [vmem:[%s219 + $0x18] sm:$0xff] %v1028
        %1045 = vst [vmem:[%s219 + $0x20] sm:$0xff] %v1029
        %1046 = vst [vmem:[%s219 + $0x28] sm:$0xff] %v1030
        %1047 = vst [vmem:[%s219 + $0x30] sm:$0xff] %v1031
        %1048 = vst [vmem:[%s219 + $0x38] sm:$0xff] %v1032
        %s1049 = sand.u32 %s134, 1
        %s1050 = scalar_lea.sflag [#allocation3], %s1049
        %s1051 = sand.u32 %s134, 1
        %s1052 = smul.addr %s1051, 64
        %s1053 = scalar_lea.vmem [#allocation2], %s1052
        // Predicated region
        $region37: #{tpu_custom_call.1} parent=35 // pred_check
          %p1054 = pneg %p144
        $region38: #{tpu_custom_call.1} parent=35 // pred_check_branch
          %1056 = sbr.rel (%p1054) target = $region40
        $region39: #{tpu_custom_call.1} parent=35 // pred_region
          %s1057 = smul.u32 8, %s23
          %s1059 = ssub.s32 1024, 1024
          %1060 = vsyncadd %s1050, %s1059
          %s1061 = smul.addr %s1057, 2
          %s1062 = smul.addr %s22, 16
          %s1063 = sadd.s32 %s1061, %s1062
          %s1064 = smul.addr %s1063, 64
          %s1065 = scalar_lea.hbm %s4, %s1064
          %s1066 = sshll.u32 %s1053, 4
          %s1067 = int_to_ptr.vmem [resolvable:$true] %s1066
          %1072 = dma.vmem_to_hbm [thread:$0]  %s1067, 1024, %s1065, %s1050, 128, 128, 8
        $region40: #{tpu_custom_call.1} parent=35 // pred_fallthru
          _
      $region36: #{tpu_custom_call.1} parent=5 // pred_fallthru
        _
      %p1073 = scmp.le.s32.totalorder 2, %s13
      // Predicated region
      $region41: #{tpu_custom_call.1} parent=5 // pred_check
        %p1074 = pneg %p1073
      $region42: #{tpu_custom_call.1} parent=5 // pred_check_branch
        %1076 = sbr.rel (%p1074) target = $region44
      $region43: #{tpu_custom_call.1} parent=5 // pred_region
        %s1077 = ssub.s32 %s13, 2
        // Predicated region
        $region45: #{tpu_custom_call.1} parent=43 // pred_check
          %p1078 = pneg %p150
        $region46: #{tpu_custom_call.1} parent=43 // pred_check_branch
          %1080 = sbr.rel (%p1078) target = $region48
        $region47: #{tpu_custom_call.1} parent=43 // pred_region
          %s1081 = sand.u32 %s135, 1
          %s1082 = scalar_lea.sflag [#allocation3], %s1081
          %s1083 = sand.u32 %s135, 1
          %s1084 = smul.addr %s1083, 64
          %s1085 = scalar_lea.vmem [#allocation2], %s1084
          %1086 = dma.done %s1082, 1024
        $region48: #{tpu_custom_call.1} parent=43 // pred_fallthru
          _
      $region44: #{tpu_custom_call.1} parent=5 // pred_fallthru
        _
    $region6: #{tpu_custom_call.1} parent=1 // loop_footer
      %s17 = sadd.s32 1, %s13
    $region7: #{tpu_custom_call.1} parent=1 // loop_footer_branch
      %12 = sbr.rel target = $region3
    $region8: #{tpu_custom_call.1} parent=1 // loop_exit
      _
    %1087 = vsyncpa [#allocation3], 1
    %s1088 = scalar_lea.sflag [#allocation3], 1
    %1089 = vsyncpa %s1088, 1

</llo_original>
